<compile_context>
chip_gen: v7x
topology: tpu7x:2x2x1
jax: 0.10.0
libtpu: 0.0.40
codegen_flags: <defaults>
</compile_context>

<pallas_src>
import functools

import jax
import jax.numpy as jnp
from jax.experimental import pallas as pl
from jax.experimental.pallas import tpu as pltpu

EPS = 1e-5


def _round_up(x, m):
    return (x + m - 1) // m * m


# ---------------------------------------------------------------------------
# Pallas kernels
# ---------------------------------------------------------------------------
def _bn_stats_kernel(x_ref, sum_ref, sq_ref):
    """Single-pass per-channel sum / sum-of-squares over tiled rows.

    x_ref:   (TM, C) tile of the flattened (M, C) input.
    sum_ref: (1, C)  accumulator, VMEM-resident across the (arbitrary) grid.
    sq_ref:  (1, C)  accumulator, VMEM-resident across the (arbitrary) grid.
    """
    @pl.when(pl.program_id(0) == 0)
    def _init():
        sum_ref[...] = jnp.zeros_like(sum_ref)
        sq_ref[...] = jnp.zeros_like(sq_ref)

    x = x_ref[...]
    sum_ref[...] += jnp.sum(x, axis=0, keepdims=True)
    sq_ref[...] += jnp.sum(x * x, axis=0, keepdims=True)


def _conv_mm_kernel(p_ref, w_ref, b_ref, o_ref, acc_ref):
    """Tiled (TM, TK) bf16 @ (TK, CoutP) bf16 -> f32 accumulate (+ bias at end).

    Grid = (M tiles [parallel], K tiles [arbitrary/reduction]).  The output
    block and the f32 accumulator stay resident across the K axis; the bias
    is added once in the finalize branch.  Output last dim is a multiple of
    128 so stores are lane-dense (unmasked vst).
    """
    k = pl.program_id(1)

    @pl.when(k == 0)
    def _init():
        acc_ref[...] = jnp.zeros_like(acc_ref)

    acc_ref[...] += jnp.dot(p_ref[...], w_ref[...],
                            preferred_element_type=jnp.float32)

    @pl.when(k == pl.num_programs(1) - 1)
    def _finalize():
        o_ref[...] = acc_ref[...] + b_ref[...]


# ---------------------------------------------------------------------------
# Wrappers
# ---------------------------------------------------------------------------
def bn_channel_stats(x2d):
    """Per-channel (sum, sum_of_squares) over rows of x2d: (M, C)."""
    M, C = x2d.shape
    tm = min(512, _round_up(M, 8))
    Mp = _round_up(M, tm)
    if Mp != M:
        # zero rows contribute nothing to sum / sum-of-squares
        x2d = jnp.pad(x2d, ((0, Mp - M), (0, 0)))
    s, sq = pl.pallas_call(
        _bn_stats_kernel,
        out_shape=(jax.ShapeDtypeStruct((1, C), jnp.float32),
                   jax.ShapeDtypeStruct((1, C), jnp.float32)),
        grid=(Mp // tm,),
        in_specs=[pl.BlockSpec((tm, C), lambda i: (i, 0))],
        out_specs=(pl.BlockSpec((1, C), lambda i: (0, 0)),
                   pl.BlockSpec((1, C), lambda i: (0, 0))),
        compiler_params=pltpu.CompilerParams(
            dimension_semantics=("arbitrary",)),  # reduction axis (resident outputs)
    )(x2d.astype(jnp.float32))
    return s[0], sq[0]


def _im2col(x_nhwc, kh, kw, stride):
    """Extract conv patches (pure data movement, XLA level)."""
    # TODO(synk): for production shapes, fuse patch extraction into the conv
    # kernel (manual DMA of overlapping row bands) so the KH*KW-expanded
    # patches never round-trip HBM; overlapping strided windows are not
    # expressible with a Blocked index_map.
    N, H, W, C = x_nhwc.shape
    HO = (H - kh) // stride + 1
    WO = (W - kw) // stride + 1
    cols = []
    for i in range(kh):
        for j in range(kw):
            cols.append(
                x_nhwc[:, i:i + stride * (HO - 1) + 1:stride,
                          j:j + stride * (WO - 1) + 1:stride, :]
            )
    # (N, HO, WO, KH*KW, C) -> (N*HO*WO, KH*KW*C); column index = tap*C + c
    patches = jnp.stack(cols, axis=3)
    return patches.reshape(N * HO * WO, kh * kw * C), HO, WO


def _pick_k_tile(Kp):
    """Largest of (512, 256, 128) that divides Kp (Kp is a multiple of 128)."""
    for cand in (512, 256, 128):
        if Kp % cand == 0:
            return min(cand, Kp)
    return Kp


def conv_matmul_pallas(patches, w_mat, bias):
    """Tiled (M, K) @ (K, Cout) + bias with lane-dense padding and bf16 MXU."""
    M, K = patches.shape
    _, Cout = w_mat.shape
    Kp = _round_up(K, 128)
    CoutP = _round_up(Cout, 128)
    tm = min(512, _round_up(M, 8))
    Mp = _round_up(M, tm)
    tk = _pick_k_tile(Kp)

    patches_p = jnp.pad(patches, ((0, Mp - M), (0, Kp - K))).astype(jnp.bfloat16)
    w_p = jnp.pad(w_mat, ((0, Kp - K), (0, CoutP - Cout))).astype(jnp.bfloat16)
    b_p = jnp.pad(bias.reshape(1, Cout).astype(jnp.float32),
                  ((0, 0), (0, CoutP - Cout)))

    flops = 2 * Mp * Kp * CoutP
    bytes_accessed = (patches_p.size * 2 + w_p.size * 2 + b_p.size * 4
                      + Mp * CoutP * 4)

    out = pl.pallas_call(
        _conv_mm_kernel,
        out_shape=jax.ShapeDtypeStruct((Mp, CoutP), jnp.float32),
        grid=(Mp // tm, Kp // tk),
        in_specs=[
            pl.BlockSpec((tm, tk), lambda i, k: (i, k)),       # patches: streamed
            pl.BlockSpec((tk, CoutP), lambda i, k: (k, 0)),    # weight:  resident per-k tile
            pl.BlockSpec((1, CoutP), lambda i, k: (0, 0)),     # bias:    VMEM-resident
        ],
        out_specs=pl.BlockSpec((tm, CoutP), lambda i, k: (i, 0)),
        scratch_shapes=[pltpu.VMEM((tm, CoutP), jnp.float32)],
        compiler_params=pltpu.CompilerParams(
            dimension_semantics=("parallel", "arbitrary"),     # megacore on M
            vmem_limit_bytes=32 * 1024 * 1024),
        cost_estimate=pl.CostEstimate(flops=flops, transcendentals=0,
                                      bytes_accessed=bytes_accessed),
    )(patches_p, w_p, b_p)
    return out[:M, :Cout]


@functools.partial(jax.jit, static_argnames=("stride",))
def simple_cnn_block(x_nchw, gamma, beta, conv_w, conv_b, stride=2):
    """Forward of SimpleCNNBlock. Input/output are NCHW like PyTorch."""
    N, C_in, H, W = x_nchw.shape
    C_out, _, KH, KW = conv_w.shape

    # channels-last so C maps to TPU lanes
    x_nhwc = jnp.transpose(x_nchw, (0, 2, 3, 1)).astype(jnp.float32)

    # 1) per-channel batch statistics (training-mode BN, biased variance)
    M = N * H * W
    sums, sumsq = bn_channel_stats(x_nhwc.reshape(M, C_in))
    mean = sums / M
    var = jnp.maximum(sumsq / M - mean * mean, 0.0)
    scale = gamma.astype(jnp.float32) * jax.lax.rsqrt(var + EPS)   # (C_in,)
    shift = beta.astype(jnp.float32) - mean * scale                # (C_in,)

    # 2) fold BN affine into conv weights / bias (conv is linear in x):
    #    conv(scale*x + shift, W, b) = conv(x, W*scale, b + sum(W*shift))
    w_hwco = jnp.transpose(conv_w.astype(jnp.float32), (2, 3, 1, 0))  # (KH,KW,Cin,Cout)
    w_folded = w_hwco * scale[None, None, :, None]
    b_folded = conv_b.astype(jnp.float32) + jnp.einsum("hwco,c->o", w_hwco, shift)
    w_mat = w_folded.reshape(KH * KW * C_in, C_out)   # row index = tap*Cin + c

    # 3) patches of the RAW input (BN already folded into the weights)
    patches, HO, WO = _im2col(x_nhwc, KH, KW, stride)

    out2d = conv_matmul_pallas(patches, w_mat, b_folded)   # (N*HO*WO, Cout) f32
    out_nhwc = out2d.reshape(N, HO, WO, C_out)
    return jnp.transpose(out_nhwc, (0, 3, 1, 2))


# ---------------------------------------------------------------------------
# Pure-JAX reference (for validation only)
# ---------------------------------------------------------------------------
def _reference(x, gamma, beta, w, b, stride):
    mean = x.mean(axis=(0, 2, 3), keepdims=True)
    var = x.var(axis=(0, 2, 3), keepdims=True)           # biased, like BN train
    xn = (x - mean) * jax.lax.rsqrt(var + EPS)
    xn = xn * gamma[None, :, None, None] + beta[None, :, None, None]
    out = jax.lax.conv_general_dilated(
        xn, w, window_strides=(stride, stride), padding="VALID",
        dimension_numbers=("NCHW", "OIHW", "NCHW"))
    return out + b[None, :, None, None]


# ---------------------------------------------------------------------------
# Demo
# ---------------------------------------------------------------------------
if __name__ == "__main__":
    # N=2, Cin=4, H=W=16, Cout=8, kernel_size=5, padding=0, stride=2
    #   -> output (2, 8, 6, 6).
    N, C_in, H, W = 2, 4, 16, 16
    C_out, K, STRIDE = 8, 5, 2

    key = jax.random.PRNGKey(0)
    kx, kg, kb, kw, kcb = jax.random.split(key, 5)

    x = jax.random.normal(kx, (N, C_in, H, W), dtype=jnp.float32)
    gamma = 1.0 + 0.1 * jax.random.normal(kg, (C_in,), dtype=jnp.float32)   # bn.weight
    beta = 0.1 * jax.random.normal(kb, (C_in,), dtype=jnp.float32)          # bn.bias
    conv_w = 0.1 * jax.random.normal(kw, (C_out, C_in, K, K), dtype=jnp.float32)
    conv_b = 0.1 * jax.random.normal(kcb, (C_out,), dtype=jnp.float32)

    out = simple_cnn_block(x, gamma, beta, conv_w, conv_b, stride=STRIDE)
    out = jax.block_until_ready(out)

    expected = (N, C_out, (H - K) // STRIDE + 1, (W - K) // STRIDE + 1)
    assert out.shape == expected, out.shape
    assert bool(jnp.all(jnp.isfinite(out)))

    ref = _reference(x, gamma, beta, conv_w, conv_b, STRIDE)
    assert bool(jnp.allclose(out, ref, atol=5e-2, rtol=5e-2)), (
        float(jnp.max(jnp.abs(out - ref))))

    print("KERNEL_OK")
</pallas_src>

<mosaic_0001>
module attributes {stable_mosaic.version = 11 : i64} {
  func.func @_bn_stats_kernel(%arg0: i32, %arg1: memref<512x4xf32, #tpu.memory_space<vmem>>, %arg2: memref<1x4xf32, #tpu.memory_space<vmem>>, %arg3: memref<1x4xf32, #tpu.memory_space<vmem>>) attributes {dimension_semantics = [#tpu.dimension_semantics<arbitrary>], iteration_bounds = array<i64: 1>, scalar_prefetch = 0 : i64, scratch_operands = 0 : i64, tpu.core_type = #tpu.core_type<tc>, window_params = [{transform_indices = @transform_0, window_bounds = array<i64: 512, 4>}, {pipeline_mode = #tpu.pipeline_mode<synchronous>, transform_indices = @transform_1, window_bounds = array<i64: 1, 4>}, {pipeline_mode = #tpu.pipeline_mode<synchronous>, transform_indices = @transform_2, window_bounds = array<i64: 1, 4>}]} {
    %c0_i32 = arith.constant 0 : i32
    %0 = arith.cmpi eq, %arg0, %c0_i32 : i32
    %1 = arith.extui %0 : i1 to i32
    %c0_i32_0 = arith.constant 0 : i32
    %2 = arith.cmpi ne, %1, %c0_i32_0 : i32
    scf.if %2 {
      %cst_11 = arith.constant 0.000000e+00 : f32
      %15 = vector.broadcast %cst_11 : f32 to vector<1x4xf32>
      %c0_12 = arith.constant 0 : index
      %c0_13 = arith.constant 0 : index
      %16 = vector.load %arg2[%c0_12, %c0_13] : memref<1x4xf32, #tpu.memory_space<vmem>>, vector<1x4xf32>
      tpu.vector_store %arg2[%c0_12, %c0_13], %15 {strides = array<i32>} : memref<1x4xf32, #tpu.memory_space<vmem>>, vector<1x4xf32>,
      %cst_14 = arith.constant 0.000000e+00 : f32
      %17 = vector.broadcast %cst_14 : f32 to vector<1x4xf32>
      %c0_15 = arith.constant 0 : index
      %c0_16 = arith.constant 0 : index
      %18 = vector.load %arg3[%c0_15, %c0_16] : memref<1x4xf32, #tpu.memory_space<vmem>>, vector<1x4xf32>
      tpu.vector_store %arg3[%c0_15, %c0_16], %17 {strides = array<i32>} : memref<1x4xf32, #tpu.memory_space<vmem>>, vector<1x4xf32>,
    } else {
    }
    %c0 = arith.constant 0 : index
    %c0_1 = arith.constant 0 : index
    %3 = vector.load %arg1[%c0, %c0_1] : memref<512x4xf32, #tpu.memory_space<vmem>>, vector<512x4xf32>
    %c0_2 = arith.constant 0 : index
    %c0_3 = arith.constant 0 : index
    %4 = vector.load %arg2[%c0_2, %c0_3] : memref<1x4xf32, #tpu.memory_space<vmem>>, vector<1x4xf32>
    %cst = arith.constant dense<0.000000e+00> : vector<4xf32>
    %5 = vector.multi_reduction <add>, %3, %cst [0] : vector<512x4xf32> to vector<4xf32>
    %6 = vector.shape_cast %5 : vector<4xf32> to vector<1x4xf32>
    %7 = arith.addf %4, %6 : vector<1x4xf32>
    %c0_4 = arith.constant 0 : index
    %c0_5 = arith.constant 0 : index
    %8 = vector.load %arg2[%c0_4, %c0_5] : memref<1x4xf32, #tpu.memory_space<vmem>>, vector<1x4xf32>
    tpu.vector_store %arg2[%c0_4, %c0_5], %7 {strides = array<i32>} : memref<1x4xf32, #tpu.memory_space<vmem>>, vector<1x4xf32>,
    %c0_6 = arith.constant 0 : index
    %c0_7 = arith.constant 0 : index
    %9 = vector.load %arg3[%c0_6, %c0_7] : memref<1x4xf32, #tpu.memory_space<vmem>>, vector<1x4xf32>
    %10 = arith.mulf %3, %3 : vector<512x4xf32>
    %cst_8 = arith.constant dense<0.000000e+00> : vector<4xf32>
    %11 = vector.multi_reduction <add>, %10, %cst_8 [0] : vector<512x4xf32> to vector<4xf32>
    %12 = vector.shape_cast %11 : vector<4xf32> to vector<1x4xf32>
    %13 = arith.addf %9, %12 : vector<1x4xf32>
    %c0_9 = arith.constant 0 : index
    %c0_10 = arith.constant 0 : index
    %14 = vector.load %arg3[%c0_9, %c0_10] : memref<1x4xf32, #tpu.memory_space<vmem>>, vector<1x4xf32>
    tpu.vector_store %arg3[%c0_9, %c0_10], %13 {strides = array<i32>} : memref<1x4xf32, #tpu.memory_space<vmem>>, vector<1x4xf32>,
    return
  }
  func.func @transform_0(%arg0: i32) -> (i32, i32) {
    %c0_i32 = arith.constant 0 : i32
    %c0_i32_0 = arith.constant 0 : i32
    return %arg0, %c0_i32 : i32, i32
  }
  func.func @transform_1(%arg0: i32) -> (i32, i32) {
    %c0_i32 = arith.constant 0 : i32
    %c0_i32_0 = arith.constant 0 : i32
    %c0_i32_1 = arith.constant 0 : i32
    return %c0_i32, %c0_i32_0 : i32, i32
  }
  func.func @transform_2(%arg0: i32) -> (i32, i32) {
    %c0_i32 = arith.constant 0 : i32
    %c0_i32_0 = arith.constant 0 : i32
    %c0_i32_1 = arith.constant 0 : i32
    return %c0_i32, %c0_i32_0 : i32, i32
  }
}

module attributes {stable_mosaic.version = 11 : i64} {
  func.func @_conv_mm_kernel(%arg0: i32, %arg1: i32, %arg2: memref<72x128xbf16, #tpu.memory_space<vmem>>, %arg3: memref<128x128xbf16, #tpu.memory_space<vmem>>, %arg4: memref<1x128xf32, #tpu.memory_space<vmem>>, %arg5: memref<72x128xf32, #tpu.memory_space<vmem>>, %arg6: memref<72x128xf32, #tpu.memory_space<vmem>>) attributes {dimension_semantics = [#tpu.dimension_semantics<parallel>, #tpu.dimension_semantics<arbitrary>], iteration_bounds = array<i64: 1, 1>, scalar_prefetch = 0 : i64, scratch_operands = 1 : i64, tpu.core_type = #tpu.core_type<tc>, window_params = [{transform_indices = @transform_0, window_bounds = array<i64: 72, 128>}, {transform_indices = @transform_1, window_bounds = array<i64: 128, 128>}, {pipeline_mode = #tpu.pipeline_mode<synchronous>, transform_indices = @transform_2, window_bounds = array<i64: 1, 128>}, {transform_indices = @transform_3, window_bounds = array<i64: 72, 128>}]} {
    %c0_i32 = arith.constant 0 : i32
    %0 = arith.cmpi eq, %arg1, %c0_i32 : i32
    %1 = arith.extui %0 : i1 to i32
    %c0_i32_0 = arith.constant 0 : i32
    %2 = arith.cmpi ne, %1, %c0_i32_0 : i32
    scf.if %2 {
      %cst_10 = arith.constant 0.000000e+00 : f32
      %12 = vector.broadcast %cst_10 : f32 to vector<72x128xf32>
      %c0_11 = arith.constant 0 : index
      %c0_12 = arith.constant 0 : index
      %13 = vector.load %arg6[%c0_11, %c0_12] : memref<72x128xf32, #tpu.memory_space<vmem>>, vector<72x128xf32>
      tpu.vector_store %arg6[%c0_11, %c0_12], %12 {strides = array<i32>} : memref<72x128xf32, #tpu.memory_space<vmem>>, vector<72x128xf32>,
    } else {
    }
    %c0 = arith.constant 0 : index
    %c0_1 = arith.constant 0 : index
    %3 = vector.load %arg6[%c0, %c0_1] : memref<72x128xf32, #tpu.memory_space<vmem>>, vector<72x128xf32>
    %c0_2 = arith.constant 0 : index
    %c0_3 = arith.constant 0 : index
    %4 = vector.load %arg2[%c0_2, %c0_3] : memref<72x128xbf16, #tpu.memory_space<vmem>>, vector<72x128xbf16>
    %c0_4 = arith.constant 0 : index
    %c0_5 = arith.constant 0 : index
    %5 = vector.load %arg3[%c0_4, %c0_5] : memref<128x128xbf16, #tpu.memory_space<vmem>>, vector<128x128xbf16>
    %cst = arith.constant dense<0.000000e+00> : vector<72x128xf32>
    %6 = tpu.matmul %4, %5, %cst {dimension_numbers = #tpu.dot_dimension_numbers<[1], [0], [0], [1], [0, 0, 1, 1], [], []>} : vector<72x128xbf16>, vector<128x128xbf16>, vector<72x128xf32> -> vector<72x128xf32>
    %7 = arith.addf %3, %6 : vector<72x128xf32>
    %c0_6 = arith.constant 0 : index
    %c0_7 = arith.constant 0 : index
    %8 = vector.load %arg6[%c0_6, %c0_7] : memref<72x128xf32, #tpu.memory_space<vmem>>, vector<72x128xf32>
    tpu.vector_store %arg6[%c0_6, %c0_7], %7 {strides = array<i32>} : memref<72x128xf32, #tpu.memory_space<vmem>>, vector<72x128xf32>,
    %c0_i32_8 = arith.constant 0 : i32
    %9 = arith.cmpi eq, %arg1, %c0_i32_8 : i32
    %10 = arith.extui %9 : i1 to i32
    %c0_i32_9 = arith.constant 0 : i32
    %11 = arith.cmpi ne, %10, %c0_i32_9 : i32
    scf.if %11 {
      %c0_10 = arith.constant 0 : index
      %c0_11 = arith.constant 0 : index
      %12 = vector.load %arg6[%c0_10, %c0_11] : memref<72x128xf32, #tpu.memory_space<vmem>>, vector<72x128xf32>
      %c0_12 = arith.constant 0 : index
      %c0_13 = arith.constant 0 : index
      %13 = vector.load %arg4[%c0_12, %c0_13] : memref<1x128xf32, #tpu.memory_space<vmem>>, vector<1x128xf32>
      %14 = vector.broadcast %13 : vector<1x128xf32> to vector<72x128xf32>
      %15 = arith.addf %12, %14 : vector<72x128xf32>
      %c0_14 = arith.constant 0 : index
      %c0_15 = arith.constant 0 : index
      %16 = vector.load %arg5[%c0_14, %c0_15] : memref<72x128xf32, #tpu.memory_space<vmem>>, vector<72x128xf32>
      tpu.vector_store %arg5[%c0_14, %c0_15], %15 {strides = array<i32>} : memref<72x128xf32, #tpu.memory_space<vmem>>, vector<72x128xf32>,
    } else {
    }
    return
  }
  func.func @transform_0(%arg0: i32, %arg1: i32) -> (i32, i32) {
    %c0_i32 = arith.constant 0 : i32
    return %arg0, %arg1 : i32, i32
  }
  func.func @transform_1(%arg0: i32, %arg1: i32) -> (i32, i32) {
    %c0_i32 = arith.constant 0 : i32
    %c0_i32_0 = arith.constant 0 : i32
    return %arg1, %c0_i32 : i32, i32
  }
  func.func @transform_2(%arg0: i32, %arg1: i32) -> (i32, i32) {
    %c0_i32 = arith.constant 0 : i32
    %c0_i32_0 = arith.constant 0 : i32
    %c0_i32_1 = arith.constant 0 : i32
    return %c0_i32, %c0_i32_0 : i32, i32
  }
  func.func @transform_3(%arg0: i32, %arg1: i32) -> (i32, i32) {
    %c0_i32 = arith.constant 0 : i32
    %c0_i32_0 = arith.constant 0 : i32
    return %arg0, %c0_i32 : i32, i32
  }
}

</mosaic_0001>

<llo_original>
// kernel: simple_cnn_block.2
$region0: #{simple_cnn_block.2}
  #allocation0 [shape = 'u32[]', space=smem, size = 0x4, offset = 0x4, fixed_abs, tag = 'smem constant byte address 0x4 - core index']
  #allocation1 [shape = 'u32[144,128]{1,0:T(1,128)}', space=vmem, size = 0x12000, scoped, tag = 'internal scratch']
  %s0 = inlined_call_operand.vmem [shape: f32[512,4], index: 0, kind: input, shape index: {}]
  %s1 = inlined_call_operand.vmem [shape: f32[1,4], index: 1, kind: output, shape index: {0}]
  %s2 = inlined_call_operand.vmem [shape: f32[1,4], index: 2, kind: output, shape index: {1}]
  %3 = xla_tuple %s1, %s2
  %s4 = sld [smem:[#allocation0]]
  $region26: #{simple_cnn_block.2} parent=0
    _
  %s6 = ssub.s32 1, %s4
  %s7 = scalar_select 0, %s6, %s4
  // Predicated region
  $region2: #{simple_cnn_block.2} parent=0 // pred_check
    _
  $region3: #{simple_cnn_block.2} parent=0 // pred_check_branch
    %9 = sbr.rel (0) target = $region5
  $region4: #{simple_cnn_block.2} parent=0 // pred_region
    _
  $region5: #{simple_cnn_block.2} parent=0 // pred_fallthru
    _
  %p10 = scmp.eq.s32.totalorder 0, 0
  // Predicated region
  $region6: #{simple_cnn_block.2} parent=0 // pred_check
    %p11 = pneg %p10
  $region7: #{simple_cnn_block.2} parent=0 // pred_check_branch
    %13 = sbr.rel (%p11) target = $region9
  $region8: #{simple_cnn_block.2} parent=0 // pred_region
    %vm14 = vcmask 24576
    %15 = vst.msk [vmem:[%s1] sm:$0x1] %vm14, 0.0
    %16 = vst.msk [vmem:[%s2] sm:$0x1] %vm14, 0.0
  $region9: #{simple_cnn_block.2} parent=0 // pred_fallthru
    _
  %v17 = vld [vmem:[%s0] sm:$0xff]
  %v18 = vld [vmem:[%s0 + $0x8] sm:$0xff]
  %v19 = vld [vmem:[%s0 + $0x10] sm:$0xff]
  %v20 = vld [vmem:[%s0 + $0x18] sm:$0xff]
  %v21 = vld [vmem:[%s0 + $0x20] sm:$0xff]
  %v22 = vld [vmem:[%s0 + $0x28] sm:$0xff]
  %v23 = vld [vmem:[%s0 + $0x30] sm:$0xff]
  %v24 = vld [vmem:[%s0 + $0x38] sm:$0xff]
  %v25 = vld [vmem:[%s0 + $0x40] sm:$0xff]
  %v26 = vld [vmem:[%s0 + $0x48] sm:$0xff]
  %v27 = vld [vmem:[%s0 + $0x50] sm:$0xff]
  %v28 = vld [vmem:[%s0 + $0x58] sm:$0xff]
  %v29 = vld [vmem:[%s0 + $0x60] sm:$0xff]
  %v30 = vld [vmem:[%s0 + $0x68] sm:$0xff]
  %v31 = vld [vmem:[%s0 + $0x70] sm:$0xff]
  %v32 = vld [vmem:[%s0 + $0x78] sm:$0xff]
  %v33 = vld [vmem:[%s0 + $0x80] sm:$0xff]
  %v34 = vld [vmem:[%s0 + $0x88] sm:$0xff]
  %v35 = vld [vmem:[%s0 + $0x90] sm:$0xff]
  %v36 = vld [vmem:[%s0 + $0x98] sm:$0xff]
  %v37 = vld [vmem:[%s0 + $0xa0] sm:$0xff]
  %v38 = vld [vmem:[%s0 + $0xa8] sm:$0xff]
  %v39 = vld [vmem:[%s0 + $0xb0] sm:$0xff]
  %v40 = vld [vmem:[%s0 + $0xb8] sm:$0xff]
  %v41 = vld [vmem:[%s0 + $0xc0] sm:$0xff]
  %v42 = vld [vmem:[%s0 + $0xc8] sm:$0xff]
  %v43 = vld [vmem:[%s0 + $0xd0] sm:$0xff]
  %v44 = vld [vmem:[%s0 + $0xd8] sm:$0xff]
  %v45 = vld [vmem:[%s0 + $0xe0] sm:$0xff]
  %v46 = vld [vmem:[%s0 + $0xe8] sm:$0xff]
  %v47 = vld [vmem:[%s0 + $0xf0] sm:$0xff]
  %v48 = vld [vmem:[%s0 + $0xf8] sm:$0xff]
  %v49 = vld [vmem:[%s0 + $0x100] sm:$0xff]
  %v50 = vld [vmem:[%s0 + $0x108] sm:$0xff]
  %v51 = vld [vmem:[%s0 + $0x110] sm:$0xff]
  %v52 = vld [vmem:[%s0 + $0x118] sm:$0xff]
  %v53 = vld [vmem:[%s0 + $0x120] sm:$0xff]
  %v54 = vld [vmem:[%s0 + $0x128] sm:$0xff]
  %v55 = vld [vmem:[%s0 + $0x130] sm:$0xff]
  %v56 = vld [vmem:[%s0 + $0x138] sm:$0xff]
  %v57 = vld [vmem:[%s0 + $0x140] sm:$0xff]
  %v58 = vld [vmem:[%s0 + $0x148] sm:$0xff]
  %v59 = vld [vmem:[%s0 + $0x150] sm:$0xff]
  %v60 = vld [vmem:[%s0 + $0x158] sm:$0xff]
  %v61 = vld [vmem:[%s0 + $0x160] sm:$0xff]
  %v62 = vld [vmem:[%s0 + $0x168] sm:$0xff]
  %v63 = vld [vmem:[%s0 + $0x170] sm:$0xff]
  %v64 = vld [vmem:[%s0 + $0x178] sm:$0xff]
  %v65 = vld [vmem:[%s0 + $0x180] sm:$0xff]
  %v66 = vld [vmem:[%s0 + $0x188] sm:$0xff]
  %v67 = vld [vmem:[%s0 + $0x190] sm:$0xff]
  %v68 = vld [vmem:[%s0 + $0x198] sm:$0xff]
  %v69 = vld [vmem:[%s0 + $0x1a0] sm:$0xff]
  %v70 = vld [vmem:[%s0 + $0x1a8] sm:$0xff]
  %v71 = vld [vmem:[%s0 + $0x1b0] sm:$0xff]
  %v72 = vld [vmem:[%s0 + $0x1b8] sm:$0xff]
  %v73 = vld [vmem:[%s0 + $0x1c0] sm:$0xff]
  %v74 = vld [vmem:[%s0 + $0x1c8] sm:$0xff]
  %v75 = vld [vmem:[%s0 + $0x1d0] sm:$0xff]
  %v76 = vld [vmem:[%s0 + $0x1d8] sm:$0xff]
  %v77 = vld [vmem:[%s0 + $0x1e0] sm:$0xff]
  %v78 = vld [vmem:[%s0 + $0x1e8] sm:$0xff]
  %v79 = vld [vmem:[%s0 + $0x1f0] sm:$0xff]
  %v80 = vld [vmem:[%s0 + $0x1f8] sm:$0xff]
  %v81 = vld [vmem:[%s1] sm:$0x1]
  %vm82 = vcmask 31744
  %v83 = vsel %vm82, %v17, 0.0
  %v84 = vsel %vm82, %v18, 0.0
  %v85 = vadd.f32 %v83, %v84
  %v86 = vsel %vm82, %v19, 0.0
  %v87 = vadd.f32 %v85, %v86
  %v88 = vsel %vm82, %v20, 0.0
  %v89 = vadd.f32 %v87, %v88
  %v90 = vsel %vm82, %v21, 0.0
  %v91 = vadd.f32 %v89, %v90
  %v92 = vsel %vm82, %v22, 0.0
  %v93 = vadd.f32 %v91, %v92
  %v94 = vsel %vm82, %v23, 0.0
  %v95 = vadd.f32 %v93, %v94
  %v96 = vsel %vm82, %v24, 0.0
  %v97 = vadd.f32 %v95, %v96
  %v98 = vsel %vm82, %v25, 0.0
  %v99 = vadd.f32 %v97, %v98
  %v100 = vsel %vm82, %v26, 0.0
  %v101 = vadd.f32 %v99, %v100
  %v102 = vsel %vm82, %v27, 0.0
  %v103 = vadd.f32 %v101, %v102
  %v104 = vsel %vm82, %v28, 0.0
  %v105 = vadd.f32 %v103, %v104
  %v106 = vsel %vm82, %v29, 0.0
  %v107 = vadd.f32 %v105, %v106
  %v108 = vsel %vm82, %v30, 0.0
  %v109 = vadd.f32 %v107, %v108
  %v110 = vsel %vm82, %v31, 0.0
  %v111 = vadd.f32 %v109, %v110
  %v112 = vsel %vm82, %v32, 0.0
  %v113 = vadd.f32 %v111, %v112
  %v114 = vsel %vm82, %v33, 0.0
  %v115 = vadd.f32 %v113, %v114
  %v116 = vsel %vm82, %v34, 0.0
  %v117 = vadd.f32 %v115, %v116
  %v118 = vsel %vm82, %v35, 0.0
  %v119 = vadd.f32 %v117, %v118
  %v120 = vsel %vm82, %v36, 0.0
  %v121 = vadd.f32 %v119, %v120
  %v122 = vsel %vm82, %v37, 0.0
  %v123 = vadd.f32 %v121, %v122
  %v124 = vsel %vm82, %v38, 0.0
  %v125 = vadd.f32 %v123, %v124
  %v126 = vsel %vm82, %v39, 0.0
  %v127 = vadd.f32 %v125, %v126
  %v128 = vsel %vm82, %v40, 0.0
  %v129 = vadd.f32 %v127, %v128
  %v130 = vsel %vm82, %v41, 0.0
  %v131 = vadd.f32 %v129, %v130
  %v132 = vsel %vm82, %v42, 0.0
  %v133 = vadd.f32 %v131, %v132
  %v134 = vsel %vm82, %v43, 0.0
  %v135 = vadd.f32 %v133, %v134
  %v136 = vsel %vm82, %v44, 0.0
  %v137 = vadd.f32 %v135, %v136
  %v138 = vsel %vm82, %v45, 0.0
  %v139 = vadd.f32 %v137, %v138
  %v140 = vsel %vm82, %v46, 0.0
  %v141 = vadd.f32 %v139, %v140
  %v142 = vsel %vm82, %v47, 0.0
  %v143 = vadd.f32 %v141, %v142
  %v144 = vsel %vm82, %v48, 0.0
  %v145 = vadd.f32 %v143, %v144
  %v146 = vsel %vm82, %v49, 0.0
  %v147 = vadd.f32 %v145, %v146
  %v148 = vsel %vm82, %v50, 0.0
  %v149 = vadd.f32 %v147, %v148
  %v150 = vsel %vm82, %v51, 0.0
  %v151 = vadd.f32 %v149, %v150
  %v152 = vsel %vm82, %v52, 0.0
  %v153 = vadd.f32 %v151, %v152
  %v154 = vsel %vm82, %v53, 0.0
  %v155 = vadd.f32 %v153, %v154
  %v156 = vsel %vm82, %v54, 0.0
  %v157 = vadd.f32 %v155, %v156
  %v158 = vsel %vm82, %v55, 0.0
  %v159 = vadd.f32 %v157, %v158
  %v160 = vsel %vm82, %v56, 0.0
  %v161 = vadd.f32 %v159, %v160
  %v162 = vsel %vm82, %v57, 0.0
  %v163 = vadd.f32 %v161, %v162
  %v164 = vsel %vm82, %v58, 0.0
  %v165 = vadd.f32 %v163, %v164
  %v166 = vsel %vm82, %v59, 0.0
  %v167 = vadd.f32 %v165, %v166
  %v168 = vsel %vm82, %v60, 0.0
  %v169 = vadd.f32 %v167, %v168
  %v170 = vsel %vm82, %v61, 0.0
  %v171 = vadd.f32 %v169, %v170
  %v172 = vsel %vm82, %v62, 0.0
  %v173 = vadd.f32 %v171, %v172
  %v174 = vsel %vm82, %v63, 0.0
  %v175 = vadd.f32 %v173, %v174
  %v176 = vsel %vm82, %v64, 0.0
  %v177 = vadd.f32 %v175, %v176
  %v178 = vsel %vm82, %v65, 0.0
  %v179 = vadd.f32 %v177, %v178
  %v180 = vsel %vm82, %v66, 0.0
  %v181 = vadd.f32 %v179, %v180
  %v182 = vsel %vm82, %v67, 0.0
  %v183 = vadd.f32 %v181, %v182
  %v184 = vsel %vm82, %v68, 0.0
  %v185 = vadd.f32 %v183, %v184
  %v186 = vsel %vm82, %v69, 0.0
  %v187 = vadd.f32 %v185, %v186
  %v188 = vsel %vm82, %v70, 0.0
  %v189 = vadd.f32 %v187, %v188
  %v190 = vsel %vm82, %v71, 0.0
  %v191 = vadd.f32 %v189, %v190
  %v192 = vsel %vm82, %v72, 0.0
  %v193 = vadd.f32 %v191, %v192
  %v194 = vsel %vm82, %v73, 0.0
  %v195 = vadd.f32 %v193, %v194
  %v196 = vsel %vm82, %v74, 0.0
  %v197 = vadd.f32 %v195, %v196
  %v198 = vsel %vm82, %v75, 0.0
  %v199 = vadd.f32 %v197, %v198
  %v200 = vsel %vm82, %v76, 0.0
  %v201 = vadd.f32 %v199, %v200
  %v202 = vsel %vm82, %v77, 0.0
  %v203 = vadd.f32 %v201, %v202
  %v204 = vsel %vm82, %v78, 0.0
  %v205 = vadd.f32 %v203, %v204
  %v206 = vsel %vm82, %v79, 0.0
  %v207 = vadd.f32 %v205, %v206
  %v208 = vsel %vm82, %v80, 0.0
  %v209 = vadd.f32 %v207, %v208
  %v210 = vrot.slane %v209, 4
  %v211 = vadd.f32 %v209, %v210
  %v212 = vrot.slane %v211, 2
  %v213 = vadd.f32 %v211, %v212
  %v214 = vrot.slane %v213, 1
  %v215 = vadd.f32 %v213, %v214
  %v216 = vadd.f32 %v81, %v215
  %vm217 = vcmask 24576
  %218 = vst.msk [vmem:[%s1] sm:$0x1] %vm217, %v216
  %v219 = vld [vmem:[%s2] sm:$0x1]
  %v220 = vmul.f32 %v17, %v17
  %v221 = vmul.f32 %v18, %v18
  %v222 = vmul.f32 %v19, %v19
  %v223 = vmul.f32 %v20, %v20
  %v224 = vmul.f32 %v21, %v21
  %v225 = vmul.f32 %v22, %v22
  %v226 = vmul.f32 %v23, %v23
  %v227 = vmul.f32 %v24, %v24
  %v228 = vmul.f32 %v25, %v25
  %v229 = vmul.f32 %v26, %v26
  %v230 = vmul.f32 %v27, %v27
  %v231 = vmul.f32 %v28, %v28
  %v232 = vmul.f32 %v29, %v29
  %v233 = vmul.f32 %v30, %v30
  %v234 = vmul.f32 %v31, %v31
  %v235 = vmul.f32 %v32, %v32
  %v236 = vmul.f32 %v33, %v33
  %v237 = vmul.f32 %v34, %v34
  %v238 = vmul.f32 %v35, %v35
  %v239 = vmul.f32 %v36, %v36
  %v240 = vmul.f32 %v37, %v37
  %v241 = vmul.f32 %v38, %v38
  %v242 = vmul.f32 %v39, %v39
  %v243 = vmul.f32 %v40, %v40
  %v244 = vmul.f32 %v41, %v41
  %v245 = vmul.f32 %v42, %v42
  %v246 = vmul.f32 %v43, %v43
  %v247 = vmul.f32 %v44, %v44
  %v248 = vmul.f32 %v45, %v45
  %v249 = vmul.f32 %v46, %v46
  %v250 = vmul.f32 %v47, %v47
  %v251 = vmul.f32 %v48, %v48
  %v252 = vmul.f32 %v49, %v49
  %v253 = vmul.f32 %v50, %v50
  %v254 = vmul.f32 %v51, %v51
  %v255 = vmul.f32 %v52, %v52
  %v256 = vmul.f32 %v53, %v53
  %v257 = vmul.f32 %v54, %v54
  %v258 = vmul.f32 %v55, %v55
  %v259 = vmul.f32 %v56, %v56
  %v260 = vmul.f32 %v57, %v57
  %v261 = vmul.f32 %v58, %v58
  %v262 = vmul.f32 %v59, %v59
  %v263 = vmul.f32 %v60, %v60
  %v264 = vmul.f32 %v61, %v61
  %v265 = vmul.f32 %v62, %v62
  %v266 = vmul.f32 %v63, %v63
  %v267 = vmul.f32 %v64, %v64
  %v268 = vmul.f32 %v65, %v65
  %v269 = vmul.f32 %v66, %v66
  %v270 = vmul.f32 %v67, %v67
  %v271 = vmul.f32 %v68, %v68
  %v272 = vmul.f32 %v69, %v69
  %v273 = vmul.f32 %v70, %v70
  %v274 = vmul.f32 %v71, %v71
  %v275 = vmul.f32 %v72, %v72
  %v276 = vmul.f32 %v73, %v73
  %v277 = vmul.f32 %v74, %v74
  %v278 = vmul.f32 %v75, %v75
  %v279 = vmul.f32 %v76, %v76
  %v280 = vmul.f32 %v77, %v77
  %v281 = vmul.f32 %v78, %v78
  %v282 = vmul.f32 %v79, %v79
  %v283 = vmul.f32 %v80, %v80
  %v284 = vsel %vm82, %v220, 0.0
  %v285 = vsel %vm82, %v221, 0.0
  %v286 = vadd.f32 %v284, %v285
  %v287 = vsel %vm82, %v222, 0.0
  %v288 = vadd.f32 %v286, %v287
  %v289 = vsel %vm82, %v223, 0.0
  %v290 = vadd.f32 %v288, %v289
  %v291 = vsel %vm82, %v224, 0.0
  %v292 = vadd.f32 %v290, %v291
  %v293 = vsel %vm82, %v225, 0.0
  %v294 = vadd.f32 %v292, %v293
  %v295 = vsel %vm82, %v226, 0.0
  %v296 = vadd.f32 %v294, %v295
  %v297 = vsel %vm82, %v227, 0.0
  %v298 = vadd.f32 %v296, %v297
  %v299 = vsel %vm82, %v228, 0.0
  %v300 = vadd.f32 %v298, %v299
  %v301 = vsel %vm82, %v229, 0.0
  %v302 = vadd.f32 %v300, %v301
  %v303 = vsel %vm82, %v230, 0.0
  %v304 = vadd.f32 %v302, %v303
  %v305 = vsel %vm82, %v231, 0.0
  %v306 = vadd.f32 %v304, %v305
  %v307 = vsel %vm82, %v232, 0.0
  %v308 = vadd.f32 %v306, %v307
  %v309 = vsel %vm82, %v233, 0.0
  %v310 = vadd.f32 %v308, %v309
  %v311 = vsel %vm82, %v234, 0.0
  %v312 = vadd.f32 %v310, %v311
  %v313 = vsel %vm82, %v235, 0.0
  %v314 = vadd.f32 %v312, %v313
  %v315 = vsel %vm82, %v236, 0.0
  %v316 = vadd.f32 %v314, %v315
  %v317 = vsel %vm82, %v237, 0.0
  %v318 = vadd.f32 %v316, %v317
  %v319 = vsel %vm82, %v238, 0.0
  %v320 = vadd.f32 %v318, %v319
  %v321 = vsel %vm82, %v239, 0.0
  %v322 = vadd.f32 %v320, %v321
  %v323 = vsel %vm82, %v240, 0.0
  %v324 = vadd.f32 %v322, %v323
  %v325 = vsel %vm82, %v241, 0.0
  %v326 = vadd.f32 %v324, %v325
  %v327 = vsel %vm82, %v242, 0.0
  %v328 = vadd.f32 %v326, %v327
  %v329 = vsel %vm82, %v243, 0.0
  %v330 = vadd.f32 %v328, %v329
  %v331 = vsel %vm82, %v244, 0.0
  %v332 = vadd.f32 %v330, %v331
  %v333 = vsel %vm82, %v245, 0.0
  %v334 = vadd.f32 %v332, %v333
  %v335 = vsel %vm82, %v246, 0.0
  %v336 = vadd.f32 %v334, %v335
  %v337 = vsel %vm82, %v247, 0.0
  %v338 = vadd.f32 %v336, %v337
  %v339 = vsel %vm82, %v248, 0.0
  %v340 = vadd.f32 %v338, %v339
  %v341 = vsel %vm82, %v249, 0.0
  %v342 = vadd.f32 %v340, %v341
  %v343 = vsel %vm82, %v250, 0.0
  %v344 = vadd.f32 %v342, %v343
  %v345 = vsel %vm82, %v251, 0.0
  %v346 = vadd.f32 %v344, %v345
  %v347 = vsel %vm82, %v252, 0.0
  %v348 = vadd.f32 %v346, %v347
  %v349 = vsel %vm82, %v253, 0.0
  %v350 = vadd.f32 %v348, %v349
  %v351 = vsel %vm82, %v254, 0.0
  %v352 = vadd.f32 %v350, %v351
  %v353 = vsel %vm82, %v255, 0.0
  %v354 = vadd.f32 %v352, %v353
  %v355 = vsel %vm82, %v256, 0.0
  %v356 = vadd.f32 %v354, %v355
  %v357 = vsel %vm82, %v257, 0.0
  %v358 = vadd.f32 %v356, %v357
  %v359 = vsel %vm82, %v258, 0.0
  %v360 = vadd.f32 %v358, %v359
  %v361 = vsel %vm82, %v259, 0.0
  %v362 = vadd.f32 %v360, %v361
  %v363 = vsel %vm82, %v260, 0.0
  %v364 = vadd.f32 %v362, %v363
  %v365 = vsel %vm82, %v261, 0.0
  %v366 = vadd.f32 %v364, %v365
  %v367 = vsel %vm82, %v262, 0.0
  %v368 = vadd.f32 %v366, %v367
  %v369 = vsel %vm82, %v263, 0.0
  %v370 = vadd.f32 %v368, %v369
  %v371 = vsel %vm82, %v264, 0.0
  %v372 = vadd.f32 %v370, %v371
  %v373 = vsel %vm82, %v265, 0.0
  %v374 = vadd.f32 %v372, %v373
  %v375 = vsel %vm82, %v266, 0.0
  %v376 = vadd.f32 %v374, %v375
  %v377 = vsel %vm82, %v267, 0.0
  %v378 = vadd.f32 %v376, %v377
  %v379 = vsel %vm82, %v268, 0.0
  %v380 = vadd.f32 %v378, %v379
  %v381 = vsel %vm82, %v269, 0.0
  %v382 = vadd.f32 %v380, %v381
  %v383 = vsel %vm82, %v270, 0.0
  %v384 = vadd.f32 %v382, %v383
  %v385 = vsel %vm82, %v271, 0.0
  %v386 = vadd.f32 %v384, %v385
  %v387 = vsel %vm82, %v272, 0.0
  %v388 = vadd.f32 %v386, %v387
  %v389 = vsel %vm82, %v273, 0.0
  %v390 = vadd.f32 %v388, %v389
  %v391 = vsel %vm82, %v274, 0.0
  %v392 = vadd.f32 %v390, %v391
  %v393 = vsel %vm82, %v275, 0.0
  %v394 = vadd.f32 %v392, %v393
  %v395 = vsel %vm82, %v276, 0.0
  %v396 = vadd.f32 %v394, %v395
  %v397 = vsel %vm82, %v277, 0.0
  %v398 = vadd.f32 %v396, %v397
  %v399 = vsel %vm82, %v278, 0.0
  %v400 = vadd.f32 %v398, %v399
  %v401 = vsel %vm82, %v279, 0.0
  %v402 = vadd.f32 %v400, %v401
  %v403 = vsel %vm82, %v280, 0.0
  %v404 = vadd.f32 %v402, %v403
  %v405 = vsel %vm82, %v281, 0.0
  %v406 = vadd.f32 %v404, %v405
  %v407 = vsel %vm82, %v282, 0.0
  %v408 = vadd.f32 %v406, %v407
  %v409 = vsel %vm82, %v283, 0.0
  %v410 = vadd.f32 %v408, %v409
  %v411 = vrot.slane %v410, 4
  %v412 = vadd.f32 %v410, %v411
  %v413 = vrot.slane %v412, 2
  %v414 = vadd.f32 %v412, %v413
  %v415 = vrot.slane %v414, 1
  %v416 = vadd.f32 %v414, %v415
  %v417 = vadd.f32 %v219, %v416
  %418 = vst.msk [vmem:[%s2] sm:$0x1] %vm217, %v417
  // Predicated region
  $region10: #{simple_cnn_block.2} parent=0 // pred_check
    _
  $region11: #{simple_cnn_block.2} parent=0 // pred_check_branch
    %420 = sbr.rel (0) target = $region13
  $region12: #{simple_cnn_block.2} parent=0 // pred_region
    _
  $region13: #{simple_cnn_block.2} parent=0 // pred_fallthru
    _
  // Predicated region
  $region14: #{simple_cnn_block.2} parent=0 // pred_check
    _
  $region15: #{simple_cnn_block.2} parent=0 // pred_check_branch
    %422 = sbr.rel (0) target = $region17
  $region16: #{simple_cnn_block.2} parent=0 // pred_region
    _
  $region17: #{simple_cnn_block.2} parent=0 // pred_fallthru
    _
  // Predicated region
  $region18: #{simple_cnn_block.2} parent=0 // pred_check
    _
  $region19: #{simple_cnn_block.2} parent=0 // pred_check_branch
    %424 = sbr.rel (0) target = $region21
  $region20: #{simple_cnn_block.2} parent=0 // pred_region
    _
  $region21: #{simple_cnn_block.2} parent=0 // pred_fallthru
    _
  // Predicated region
  $region22: #{simple_cnn_block.2} parent=0 // pred_check
    _
  $region23: #{simple_cnn_block.2} parent=0 // pred_check_branch
    %426 = sbr.rel (0) target = $region25
  $region24: #{simple_cnn_block.2} parent=0 // pred_region
    _
  $region25: #{simple_cnn_block.2} parent=0 // pred_fallthru
    _

// kernel: simple_cnn_block.3
$region0: #{simple_cnn_block.3}
  #allocation0 [shape = 'u32[]', space=smem, size = 0x4, offset = 0x4, fixed_abs, tag = 'smem constant byte address 0x4 - core index']
  #allocation1 [shape = 'u32[144,128]{1,0:T(1,128)}', space=vmem, size = 0x12000, scoped, tag = 'internal scratch']
  #allocation2 [shape = 'f32[72,128]{1,0:T(8,128)}', space=vmem, size = 0x9000, scoped, tag = 'scratch operand']
  %s0 = inlined_call_operand.vmem [shape: bf16[72,128], index: 0, kind: input, shape index: {}]
  %s1 = inlined_call_operand.vmem [shape: bf16[128,128], index: 1, kind: input, shape index: {}]
  %s2 = inlined_call_operand.vmem [shape: f32[1,128], index: 2, kind: input, shape index: {}]
  %s3 = inlined_call_operand.vmem [shape: f32[72,128], index: 3, kind: output, shape index: {}]
  %s4 = sld [smem:[#allocation0]]
  $region30: #{simple_cnn_block.3} parent=0
    _
  %s6 = ssub.s32 1, %s4
  %s7 = scalar_select 0, %s6, %s4
  // Predicated region
  $region2: #{simple_cnn_block.3} parent=0 // pred_check
    _
  $region3: #{simple_cnn_block.3} parent=0 // pred_check_branch
    %9 = sbr.rel (0) target = $region5
  $region4: #{simple_cnn_block.3} parent=0 // pred_region
    _
  $region5: #{simple_cnn_block.3} parent=0 // pred_fallthru
    _
  // Predicated region
  $region6: #{simple_cnn_block.3} parent=0 // pred_check
    _
  $region7: #{simple_cnn_block.3} parent=0 // pred_check_branch
    %11 = sbr.rel (0) target = $region9
  $region8: #{simple_cnn_block.3} parent=0 // pred_region
    _
  $region9: #{simple_cnn_block.3} parent=0 // pred_fallthru
    _
  // Predicated region
  $region10: #{simple_cnn_block.3} parent=0 // pred_check
    _
  $region11: #{simple_cnn_block.3} parent=0 // pred_check_branch
    %13 = sbr.rel (0) target = $region13
  $region12: #{simple_cnn_block.3} parent=0 // pred_region
    _
  $region13: #{simple_cnn_block.3} parent=0 // pred_fallthru
    _
  %p15 = scmp.eq.s32.totalorder 0, 0
  // Predicated region
  $region14: #{simple_cnn_block.3} parent=0 // pred_check
    %p16 = pneg %p15
  $region15: #{simple_cnn_block.3} parent=0 // pred_check_branch
    %18 = sbr.rel (%p16) target = $region17
  $region16: #{simple_cnn_block.3} parent=0 // pred_region
    %19 = vst [vmem:[#allocation2] sm:$0xff] 0.0
    %20 = vst [vmem:[#allocation2 + $0x8] sm:$0xff] 0.0
    %21 = vst [vmem:[#allocation2 + $0x10] sm:$0xff] 0.0
    %22 = vst [vmem:[#allocation2 + $0x18] sm:$0xff] 0.0
    %23 = vst [vmem:[#allocation2 + $0x20] sm:$0xff] 0.0
    %24 = vst [vmem:[#allocation2 + $0x28] sm:$0xff] 0.0
    %25 = vst [vmem:[#allocation2 + $0x30] sm:$0xff] 0.0
    %26 = vst [vmem:[#allocation2 + $0x38] sm:$0xff] 0.0
    %27 = vst [vmem:[#allocation2 + $0x40] sm:$0xff] 0.0
  $region17: #{simple_cnn_block.3} parent=0 // pred_fallthru
    _
  %v28 = vld [vmem:[#allocation2] sm:$0xff]
  %v29 = vld [vmem:[#allocation2 + $0x8] sm:$0xff]
  %v30 = vld [vmem:[#allocation2 + $0x10] sm:$0xff]
  %v31 = vld [vmem:[#allocation2 + $0x18] sm:$0xff]
  %v32 = vld [vmem:[#allocation2 + $0x20] sm:$0xff]
  %v33 = vld [vmem:[#allocation2 + $0x28] sm:$0xff]
  %v34 = vld [vmem:[#allocation2 + $0x30] sm:$0xff]
  %v35 = vld [vmem:[#allocation2 + $0x38] sm:$0xff]
  %v36 = vld [vmem:[#allocation2 + $0x40] sm:$0xff]
  %v37 = vld [vmem:[%s0] sm:$0xf]
  %v38 = vld [vmem:[%s0 + $0x4] sm:$0xf]
  %v39 = vld [vmem:[%s0 + $0x8] sm:$0xf]
  %v40 = vld [vmem:[%s0 + $0xc] sm:$0xf]
  %v41 = vld [vmem:[%s0 + $0x10] sm:$0xf]
  %v42 = vld [vmem:[%s0 + $0x14] sm:$0xf]
  %v43 = vld [vmem:[%s0 + $0x18] sm:$0xf]
  %v44 = vld [vmem:[%s0 + $0x1c] sm:$0xf]
  %v45 = vld [vmem:[%s0 + $0x20] sm:$0xf]
  %v46 = vld [vmem:[%s1] sm:$0xf]
  %v47 = vld [vmem:[%s1 + $0x4] sm:$0xf]
  %v48 = vld [vmem:[%s1 + $0x8] sm:$0xf]
  %v49 = vld [vmem:[%s1 + $0xc] sm:$0xf]
  %v50 = vld [vmem:[%s1 + $0x10] sm:$0xf]
  %v51 = vld [vmem:[%s1 + $0x14] sm:$0xf]
  %v52 = vld [vmem:[%s1 + $0x18] sm:$0xf]
  %v53 = vld [vmem:[%s1 + $0x1c] sm:$0xf]
  %v54 = vld [vmem:[%s1 + $0x20] sm:$0xf]
  %v55 = vld [vmem:[%s1 + $0x24] sm:$0xf]
  %v56 = vld [vmem:[%s1 + $0x28] sm:$0xf]
  %v57 = vld [vmem:[%s1 + $0x2c] sm:$0xf]
  %v58 = vld [vmem:[%s1 + $0x30] sm:$0xf]
  %v59 = vld [vmem:[%s1 + $0x34] sm:$0xf]
  %v60 = vld [vmem:[%s1 + $0x38] sm:$0xf]
  %v61 = vld [vmem:[%s1 + $0x3c] sm:$0xf]
  %v71 = vunpack.c.l.b16 %v37
  %v72 = vunpack.c.l.b16 %v38
  %v73 = vunpack.c.l.b16 %v39
  %v74 = vunpack.c.l.b16 %v40
  %v75 = vunpack.c.l.b16 %v41
  %v76 = vunpack.c.l.b16 %v42
  %v77 = vunpack.c.l.b16 %v43
  %v78 = vunpack.c.l.b16 %v44
  %v79 = vunpack.c.l.b16 %v45
  %v80 = vpack.c.b16 %v72, %v71
  %v81 = vpack.c.b16 %v74, %v73
  %v82 = vpack.c.b16 %v76, %v75
  %v83 = vpack.c.b16 %v78, %v77
  %v84 = vpack.c.b16 %v79, %v79
  %v106 = vunpack.c.l.b16 %v46
  %v107 = vunpack.c.l.b16 %v47
  %v108 = vunpack.c.l.b16 %v48
  %v109 = vunpack.c.l.b16 %v49
  %v110 = vunpack.c.l.b16 %v50
  %v111 = vunpack.c.l.b16 %v51
  %v112 = vunpack.c.l.b16 %v52
  %v113 = vunpack.c.l.b16 %v53
  %v114 = vunpack.c.l.b16 %v54
  %v115 = vunpack.c.l.b16 %v55
  %v116 = vunpack.c.l.b16 %v56
  %v117 = vunpack.c.l.b16 %v57
  %v118 = vunpack.c.l.b16 %v58
  %v119 = vunpack.c.l.b16 %v59
  %v120 = vunpack.c.l.b16 %v60
  %v121 = vunpack.c.l.b16 %v61
  %v122 = vpack.c.b16 %v107, %v106
  %v123 = vpack.c.b16 %v109, %v108
  %v124 = vpack.c.b16 %v111, %v110
  %v125 = vpack.c.b16 %v113, %v112
  %v126 = vpack.c.b16 %v115, %v114
  %v127 = vpack.c.b16 %v117, %v116
  %v128 = vpack.c.b16 %v119, %v118
  %v129 = vpack.c.b16 %v121, %v120
  %138 = vmatprep.subr.bf16.mxu0 0
  %139 = vmatpush1.bf16.msra.mxu0 %v122
  %140 = vmatprep.subr.bf16.mxu0 0
  %141 = vmatpush1.bf16.msra.mxu0 %v123
  %142 = vmatprep.subr.bf16.mxu0 0
  %143 = vmatpush1.bf16.msra.mxu0 %v124
  %144 = vmatprep.subr.bf16.mxu0 0
  %145 = vmatpush1.bf16.msra.mxu0 %v125
  %146 = vmatprep.subr.bf16.mxu0 0
  %147 = vmatpush1.bf16.msra.mxu0 %v126
  %148 = vmatprep.subr.bf16.mxu0 0
  %149 = vmatpush1.bf16.msra.mxu0 %v127
  %150 = vmatprep.subr.bf16.mxu0 0
  %151 = vmatpush1.bf16.msra.mxu0 %v128
  %152 = vmatprep.subr.bf16.mxu0 0
  %153 = vmatpush1.bf16.msra.mxu0 %v129
  %154 = vmatprep.subr.bf16.mxu0 0
  %155 = vmatpush1.bf16.msra.mxu0 0
  %156 = vmatprep.subr.bf16.mxu0 0
  %157 = vmatpush1.bf16.msra.mxu0 0
  %158 = vmatprep.subr.bf16.mxu0 0
  %159 = vmatpush1.bf16.msra.mxu0 0
  %160 = vmatprep.subr.bf16.mxu0 0
  %161 = vmatpush1.bf16.msra.mxu0 0
  %162 = vmatprep.subr.bf16.mxu0 0
  %163 = vmatpush1.bf16.msra.mxu0 0
  %164 = vmatprep.subr.bf16.mxu0 0
  %165 = vmatpush1.bf16.msra.mxu0 0
  %166 = vmatprep.subr.bf16.mxu0 0
  %167 = vmatpush1.bf16.msra.mxu0 0
  %168 = vmatprep.subr.bf16.mxu0 0
  %169 = vmatpush1.bf16.msra.mxu0 0
  %170 = vmatprep.mubr.bf16.mxu0 0
  %171 = vmatmul.mubr.bf16.gmra.mrb[0].mxu0 %v80
  %v172 = vpop.f32.mrb[0].mxu0
  %v173 = vadd.f32 0.0, %v172
  %v174 = vpop.f32.mrb[0].mxu0
  %v175 = vpop.f32.mrb[0].mxu0
  %v176 = vadd.f32 0.0, %v175
  %v177 = vpop.f32.mrb[0].mxu0
  %178 = vmatprep.mubr.bf16.mxu0 0
  %179 = vmatmul.mubr.bf16.gmra.mrb[0].mxu0 %v81
  %v180 = vpop.f32.mrb[0].mxu0
  %v181 = vadd.f32 0.0, %v180
  %v182 = vpop.f32.mrb[0].mxu0
  %v183 = vpop.f32.mrb[0].mxu0
  %v184 = vadd.f32 0.0, %v183
  %v185 = vpop.f32.mrb[0].mxu0
  %186 = vmatprep.mubr.bf16.mxu0 0
  %187 = vmatmul.mubr.bf16.gmra.mrb[0].mxu0 %v82
  %v188 = vpop.f32.mrb[0].mxu0
  %v189 = vadd.f32 0.0, %v188
  %v190 = vpop.f32.mrb[0].mxu0
  %v191 = vpop.f32.mrb[0].mxu0
  %v192 = vadd.f32 0.0, %v191
  %v193 = vpop.f32.mrb[0].mxu0
  %194 = vmatprep.mubr.bf16.mxu0 0
  %195 = vmatmul.mubr.bf16.gmra.mrb[0].mxu0 %v83
  %v196 = vpop.f32.mrb[0].mxu0
  %v197 = vadd.f32 0.0, %v196
  %v198 = vpop.f32.mrb[0].mxu0
  %v199 = vpop.f32.mrb[0].mxu0
  %v200 = vadd.f32 0.0, %v199
  %v201 = vpop.f32.mrb[0].mxu0
  %202 = vmatprep.mubr.bf16.mxu0 0
  %203 = vmatmul.mubr.bf16.gmra.mrb[0].mxu0 %v84
  %v204 = vpop.f32.mrb[0].mxu0
  %v205 = vadd.f32 0.0, %v204
  %v206 = vpop.f32.mrb[0].mxu0
  %v207 = vpop.f32.mrb[0].mxu0
  %v208 = vpop.f32.mrb[0].mxu0
  %209 = vdwg.mxu0
  %v210 = vadd.f32 %v28, %v173
  %v211 = vadd.f32 %v29, %v176
  %v212 = vadd.f32 %v30, %v181
  %v213 = vadd.f32 %v31, %v184
  %v214 = vadd.f32 %v32, %v189
  %v215 = vadd.f32 %v33, %v192
  %v216 = vadd.f32 %v34, %v197
  %v217 = vadd.f32 %v35, %v200
  %v218 = vadd.f32 %v36, %v205
  %219 = vst [vmem:[#allocation2] sm:$0xff] %v210
  %220 = vst [vmem:[#allocation2 + $0x8] sm:$0xff] %v211
  %221 = vst [vmem:[#allocation2 + $0x10] sm:$0xff] %v212
  %222 = vst [vmem:[#allocation2 + $0x18] sm:$0xff] %v213
  %223 = vst [vmem:[#allocation2 + $0x20] sm:$0xff] %v214
  %224 = vst [vmem:[#allocation2 + $0x28] sm:$0xff] %v215
  %225 = vst [vmem:[#allocation2 + $0x30] sm:$0xff] %v216
  %226 = vst [vmem:[#allocation2 + $0x38] sm:$0xff] %v217
  %227 = vst [vmem:[#allocation2 + $0x40] sm:$0xff] %v218
  // Predicated region
  $region18: #{simple_cnn_block.3} parent=0 // pred_check
    %p228 = pneg %p15
  $region19: #{simple_cnn_block.3} parent=0 // pred_check_branch
    %230 = sbr.rel (%p228) target = $region21
  $region20: #{simple_cnn_block.3} parent=0 // pred_region
    %v231 = vld [vmem:[#allocation2] sm:$0xff]
    %v232 = vld [vmem:[#allocation2 + $0x8] sm:$0xff]
    %v233 = vld [vmem:[#allocation2 + $0x10] sm:$0xff]
    %v234 = vld [vmem:[#allocation2 + $0x18] sm:$0xff]
    %v235 = vld [vmem:[#allocation2 + $0x20] sm:$0xff]
    %v236 = vld [vmem:[#allocation2 + $0x28] sm:$0xff]
    %v237 = vld [vmem:[#allocation2 + $0x30] sm:$0xff]
    %v238 = vld [vmem:[#allocation2 + $0x38] sm:$0xff]
    %v239 = vld [vmem:[#allocation2 + $0x40] sm:$0xff]
    %v240 = vld [vmem:[%s2] sm:$0x1]
    %v242 = vlaneseq
    %v243 = vshrl.u32 %v242, 7
    %v244 = vsub.s32 0, %v243
    %v245 = vrot.slane %v240, %v244
    %v247 = vadd.f32 %v231, %v245
    %v248 = vadd.f32 %v232, %v245
    %v249 = vadd.f32 %v233, %v245
    %v250 = vadd.f32 %v234, %v245
    %v251 = vadd.f32 %v235, %v245
    %v252 = vadd.f32 %v236, %v245
    %v253 = vadd.f32 %v237, %v245
    %v254 = vadd.f32 %v238, %v245
    %v255 = vadd.f32 %v239, %v245
    %256 = vst [vmem:[%s3] sm:$0xff] %v247
    %257 = vst [vmem:[%s3 + $0x8] sm:$0xff] %v248
    %258 = vst [vmem:[%s3 + $0x10] sm:$0xff] %v249
    %259 = vst [vmem:[%s3 + $0x18] sm:$0xff] %v250
    %260 = vst [vmem:[%s3 + $0x20] sm:$0xff] %v251
    %261 = vst [vmem:[%s3 + $0x28] sm:$0xff] %v252
    %262 = vst [vmem:[%s3 + $0x30] sm:$0xff] %v253
    %263 = vst [vmem:[%s3 + $0x38] sm:$0xff] %v254
    %264 = vst [vmem:[%s3 + $0x40] sm:$0xff] %v255
  $region21: #{simple_cnn_block.3} parent=0 // pred_fallthru
    _
  // Predicated region
  $region22: #{simple_cnn_block.3} parent=0 // pred_check
    _
  $region23: #{simple_cnn_block.3} parent=0 // pred_check_branch
    %266 = sbr.rel (0) target = $region25
  $region24: #{simple_cnn_block.3} parent=0 // pred_region
    _
  $region25: #{simple_cnn_block.3} parent=0 // pred_fallthru
    _
  // Predicated region
  $region26: #{simple_cnn_block.3} parent=0 // pred_check
    _
  $region27: #{simple_cnn_block.3} parent=0 // pred_check_branch
    %268 = sbr.rel (0) target = $region29
  $region28: #{simple_cnn_block.3} parent=0 // pred_region
    _
  $region29: #{simple_cnn_block.3} parent=0 // pred_fallthru
    _

</llo_original>
